<compile_context>
chip_gen: v7x
topology: tpu7x:2x2x1
jax: 0.10.0
libtpu: 0.0.40
codegen_flags: <defaults>
</compile_context>

<pallas_src>
import functools

import jax
import jax.numpy as jnp
from jax.experimental import pallas as pl
from jax.experimental.pallas import tpu as pltpu

HIDDEN = 100
HIDDEN_PAD = 128          # pad 100 -> 128: full-lane vregs (numerically exact)
W3_ROWS = 8               # w3 stored as an 8-sublane row block (row 0 real, rest 0)
DEFAULT_TILE_B = 4096     # rows per grid step; multiple of 256
VMEM_LIMIT_BYTES = 48 * 1024 * 1024   # < v7x 64 MiB/TC physical; >> per-tile need


def _round_up(n, m):
    return (n + m - 1) // m * m


def _mlp_kernel(x_ref, w1_ref, b1_ref, w2_ref, b2_ref, w3_ref, b3_ref, o_ref,
                *, act_dtype):
    compute_dtype = w1_ref.dtype
    # Cast x to the MXU operand dtype in-kernel (one VALU cast per loaded vreg)
    # so the wrapper never materializes an x.astype() copy in HBM.
    x = x_ref[...].astype(compute_dtype)

    # layer1 -> tanh   (dropout = identity at inference)
    a1 = jnp.dot(x, w1_ref[...], preferred_element_type=jnp.float32)
    h1 = jnp.tanh(a1.astype(act_dtype) + b1_ref[...].astype(act_dtype))

    # layer2 -> tanh   (dropout = identity at inference)
    a2 = jnp.dot(h1.astype(compute_dtype), w2_ref[...],
                 preferred_element_type=jnp.float32)
    h2 = jnp.tanh(a2.astype(act_dtype) + b2_ref[...].astype(act_dtype))

    # layer3: transpose h2 on the XLU and run one 8-row matmul against the w3
    # row -> lane-dense (1, tile_b) result (instead of an output-width-1 MXU
    # matmul and a column of masked 1-lane stores).
    h2t = jnp.transpose(h2.astype(jnp.float32))         # (HIDDEN_PAD, tile_b)
    rows = jnp.dot(w3_ref[...], h2t, preferred_element_type=jnp.float32)
    row = rows[0:1, :] + b3_ref[...]                    # (1, tile_b)
    o_ref[...] = row[None].astype(o_ref.dtype)          # block (1, 1, tile_b)


def prepare_params(params, compute_dtype=jnp.bfloat16):
    """Zero-pad HIDDEN 100->128, reshape w3 into a row block, cast MXU operands.

    Padding is numerically exact (padded hidden lanes stay tanh(0+0)=0 and the
    matching weight rows/lanes are 0).  Weights (MXU operands) default to bf16:
    the native MXU dtype on v5e/v6e/v7x (~2-3x fewer vmatmul passes than f32)
    and half the streamed weight bytes.  Biases and w3 stay f32 (VPU bias-add
    and the small final matmul run in f32).
    """
    w1, b1, w2, b2, w3, b3 = params
    F = w1.shape[0]
    w1p = jnp.zeros((F, HIDDEN_PAD), jnp.float32).at[:, :HIDDEN].set(w1)
    b1p = jnp.zeros((1, HIDDEN_PAD), jnp.float32).at[:, :HIDDEN].set(b1)
    w2p = jnp.zeros((HIDDEN_PAD, HIDDEN_PAD), jnp.float32).at[:HIDDEN, :HIDDEN].set(w2)
    b2p = jnp.zeros((1, HIDDEN_PAD), jnp.float32).at[:, :HIDDEN].set(b2)
    # w3 (HIDDEN, 1) -> row block (8, HIDDEN_PAD); only row 0 is real so the
    # layer-3 matmul runs at the MXU's native 8-sublane granularity.
    w3p = jnp.zeros((W3_ROWS, HIDDEN_PAD), jnp.float32).at[0, :HIDDEN].set(w3[:, 0])
    b3p = b3.astype(jnp.float32).reshape(1, 1)
    return (w1p.astype(compute_dtype), b1p,
            w2p.astype(compute_dtype), b2p,
            w3p, b3p)


def linear_nn_forward(x, padded_params, *, tile_b=None,
                      act_dtype=jnp.float32, core_parallel=False):
    """Batch-tiled fused MLP forward.  x: [B, F] f32 -> [B, 1] f32.

    act_dtype: dtype for bias-add/tanh.  Keep f32 on v5e (no bf16 VPU/EUP);
      jnp.bfloat16 on v6e/v7x halves EUP tanh work and removes per-layer casts.
    core_parallel: on v7x, request an explicit 2-TensorCore split of the batch
      grid axis (verify the split in xprof).
    """
    w1, b1, w2, b2, w3, b3 = padded_params
    B, F = x.shape
    assert w1.shape == (F, HIDDEN_PAD)

    if tile_b is None:
        tile_b = DEFAULT_TILE_B
    # Multiple of 256 keeps every block a whole number of native (8,128) /
    # (16,128) tiles for both f32 and bf16; clamp to the batch so tiny batches
    # use a single tile.
    tile_b = _round_up(min(tile_b, B), 256)
    # cdiv grid: no wrapper-side jnp.pad of x (that would be a full extra HBM
    # read+write pass); the partial last tile's OOB rows are dropped below.
    num_tiles = pl.cdiv(B, tile_b)

    dim_sem = (pltpu.CORE_PARALLEL,) if core_parallel else ("parallel",)

    kernel = functools.partial(_mlp_kernel, act_dtype=act_dtype)
    out = pl.pallas_call(
        kernel,
        # Lane-dense output: one (1, tile_b) row per tile instead of a
        # (tile_b, 1) column of masked stores / strided writeback.
        out_shape=jax.ShapeDtypeStruct((num_tiles, 1, tile_b), jnp.float32),
        grid_spec=pltpu.PrefetchScalarGridSpec(
            num_scalar_prefetch=0,
            grid=(num_tiles,),
            in_specs=[
                # x: one batch tile per grid step (double-buffered DMA stream),
                # kept f32 in HBM and cast to the MXU dtype inside the kernel.
                pl.BlockSpec((tile_b, F), lambda i: (i, 0)),
                # Weights / biases: constant index_map -> DMA'd once and kept
                # VMEM-resident across the whole grid.
                pl.BlockSpec((F, HIDDEN_PAD), lambda i: (0, 0)),
                pl.BlockSpec((1, HIDDEN_PAD), lambda i: (0, 0)),
                pl.BlockSpec((HIDDEN_PAD, HIDDEN_PAD), lambda i: (0, 0)),
                pl.BlockSpec((1, HIDDEN_PAD), lambda i: (0, 0)),
                pl.BlockSpec((W3_ROWS, HIDDEN_PAD), lambda i: (0, 0)),
                pl.BlockSpec((1, 1), lambda i: (0, 0)),
            ],
            out_specs=pl.BlockSpec((1, 1, tile_b), lambda i: (i, 0, 0)),
        ),
        compiler_params=pltpu.CompilerParams(
            dimension_semantics=dim_sem,
            # Raise the scoped-VMEM ceiling (16 MiB default on v5e, 32 MiB on
            # v6e/v7x) so large batch tiles compile without spilling; stays
            # under v7x's 64 MiB-per-TensorCore physical VMEM.
            vmem_limit_bytes=VMEM_LIMIT_BYTES,
        ),
    )(x, w1, b1, w2, b2, w3, b3)
    # (num_tiles, 1, tile_b) -> (num_tiles*tile_b, 1); drop ragged-tail rows.
    return out.reshape(-1, 1)[:B]


# ------------------------- init / reference (f32) ---------------------------

def _xavier_uniform(key, fan_in, fan_out):
    bound = jnp.sqrt(6.0 / (fan_in + fan_out))
    # Stored as [in, out] (transposed vs PyTorch's [out, in]) -> x @ W + b.
    return jax.random.uniform(
        key, (fan_in, fan_out), jnp.float32, minval=-bound, maxval=bound)


def _linear_bias(key, fan_in, fan_out):
    # PyTorch nn.Linear default bias init: U(-1/sqrt(fan_in), 1/sqrt(fan_in)).
    bound = 1.0 / jnp.sqrt(jnp.float32(fan_in))
    return jax.random.uniform(
        key, (1, fan_out), jnp.float32, minval=-bound, maxval=bound)


def init_params(key, input_size):
    k1, k2, k3, k4, k5, k6 = jax.random.split(key, 6)
    w1 = _xavier_uniform(k1, input_size, HIDDEN)
    b1 = _linear_bias(k2, input_size, HIDDEN)
    w2 = _xavier_uniform(k3, HIDDEN, HIDDEN)
    b2 = _linear_bias(k4, HIDDEN, HIDDEN)
    w3 = _xavier_uniform(k5, HIDDEN, 1)
    b3 = _linear_bias(k6, HIDDEN, 1)
    return (w1, b1, w2, b2, w3, b3)


def reference_forward(x, params):
    w1, b1, w2, b2, w3, b3 = params
    h1 = jnp.tanh(x @ w1 + b1)
    h2 = jnp.tanh(h1 @ w2 + b2)
    return h2 @ w3 + b3


if __name__ == "__main__":
    key = jax.random.PRNGKey(0)
    k_param, k_x, k_x2, k_x3 = jax.random.split(key, 4)

    input_size = 32
    params = init_params(k_param, input_size)

    # --- f32 MXU path, batch = exactly one 256-row tile ----------------------
    x = jax.random.normal(k_x, (256, input_size), jnp.float32)
    ref = reference_forward(x, params)
    params_f32 = prepare_params(params, jnp.float32)
    out = jax.block_until_ready(linear_nn_forward(x, params_f32))
    assert out.shape == (256, 1)
    assert jnp.allclose(out, ref, atol=1e-4, rtol=1e-4)

    # --- default bf16 MXU-operand path (x quantized in-kernel) ---------------
    # Note: x itself is quantized to bf16 for the MXU (not just the weights);
    # f32 accumulation and f32 bias/tanh are kept.
    params_bf16 = prepare_params(params)          # compute_dtype=bf16 default
    out_bf16 = jax.block_until_ready(linear_nn_forward(x, params_bf16))
    assert out_bf16.shape == (256, 1)
    assert jnp.allclose(out_bf16, ref, atol=5e-2, rtol=5e-2)

    # --- ragged multi-tile path: cdiv grid with a partial last tile ----------
    x_big = jax.random.normal(k_x2, (300, input_size), jnp.float32)
    out_big = jax.block_until_ready(
        linear_nn_forward(x_big, params_f32, tile_b=256))
    ref_big = reference_forward(x_big, params)
    assert out_big.shape == (300, 1)
    assert jnp.allclose(out_big, ref_big, atol=1e-4, rtol=1e-4)

    # --- tiny batch: single partial tile --------------------------------------
    x_small = jax.random.normal(k_x3, (8, input_size), jnp.float32)
    out_small = jax.block_until_ready(linear_nn_forward(x_small, params_f32))
    ref_small = reference_forward(x_small, params)
    assert out_small.shape == (8, 1)
    assert jnp.allclose(out_small, ref_small, atol=1e-4, rtol=1e-4)

    print("KERNEL_OK")
</pallas_src>

<mosaic_0001>
module attributes {stable_mosaic.version = 11 : i64} {
  func.func @_mlp_kernel(%arg0: i32, %arg1: memref<256x32xf32, #tpu.memory_space<vmem>>, %arg2: memref<32x128xf32, #tpu.memory_space<vmem>>, %arg3: memref<1x128xf32, #tpu.memory_space<vmem>>, %arg4: memref<128x128xf32, #tpu.memory_space<vmem>>, %arg5: memref<1x128xf32, #tpu.memory_space<vmem>>, %arg6: memref<8x128xf32, #tpu.memory_space<vmem>>, %arg7: memref<1x1xf32, #tpu.memory_space<vmem>>, %arg8: memref<1x1x256xf32, #tpu.memory_space<vmem>>) attributes {dimension_semantics = [#tpu.dimension_semantics<parallel>], iteration_bounds = array<i64: 1>, scalar_prefetch = 0 : i64, scratch_operands = 0 : i64, tpu.core_type = #tpu.core_type<tc>, window_params = [{transform_indices = @transform_0, window_bounds = array<i64: 256, 32>}, {pipeline_mode = #tpu.pipeline_mode<synchronous>, transform_indices = @transform_1, window_bounds = array<i64: 32, 128>}, {pipeline_mode = #tpu.pipeline_mode<synchronous>, transform_indices = @transform_2, window_bounds = array<i64: 1, 128>}, {pipeline_mode = #tpu.pipeline_mode<synchronous>, transform_indices = @transform_3, window_bounds = array<i64: 128, 128>}, {pipeline_mode = #tpu.pipeline_mode<synchronous>, transform_indices = @transform_4, window_bounds = array<i64: 1, 128>}, {pipeline_mode = #tpu.pipeline_mode<synchronous>, transform_indices = @transform_5, window_bounds = array<i64: 8, 128>}, {pipeline_mode = #tpu.pipeline_mode<synchronous>, transform_indices = @transform_6, window_bounds = array<i64: 1, 1>}, {transform_indices = @transform_7, window_bounds = array<i64: 1, 1, 256>}]} {
    %c0 = arith.constant 0 : index
    %c0_0 = arith.constant 0 : index
    %0 = vector.load %arg1[%c0, %c0_0] : memref<256x32xf32, #tpu.memory_space<vmem>>, vector<256x32xf32>
    %c0_1 = arith.constant 0 : index
    %c0_2 = arith.constant 0 : index
    %1 = vector.load %arg2[%c0_1, %c0_2] : memref<32x128xf32, #tpu.memory_space<vmem>>, vector<32x128xf32>
    %cst = arith.constant dense<0.000000e+00> : vector<256x128xf32>
    %2 = tpu.matmul %0, %1, %cst {dimension_numbers = #tpu.dot_dimension_numbers<[1], [0], [0], [1], [0, 0, 1, 1], [], []>} : vector<256x32xf32>, vector<32x128xf32>, vector<256x128xf32> -> vector<256x128xf32>
    %c0_3 = arith.constant 0 : index
    %c0_4 = arith.constant 0 : index
    %3 = vector.load %arg3[%c0_3, %c0_4] : memref<1x128xf32, #tpu.memory_space<vmem>>, vector<1x128xf32>
    %4 = vector.broadcast %3 : vector<1x128xf32> to vector<256x128xf32>
    %5 = arith.addf %2, %4 : vector<256x128xf32>
    %6 = math.tanh %5 : vector<256x128xf32>
    %c0_5 = arith.constant 0 : index
    %c0_6 = arith.constant 0 : index
    %7 = vector.load %arg4[%c0_5, %c0_6] : memref<128x128xf32, #tpu.memory_space<vmem>>, vector<128x128xf32>
    %cst_7 = arith.constant dense<0.000000e+00> : vector<256x128xf32>
    %8 = tpu.matmul %6, %7, %cst_7 {dimension_numbers = #tpu.dot_dimension_numbers<[1], [0], [0], [1], [0, 0, 1, 1], [], []>} : vector<256x128xf32>, vector<128x128xf32>, vector<256x128xf32> -> vector<256x128xf32>
    %c0_8 = arith.constant 0 : index
    %c0_9 = arith.constant 0 : index
    %9 = vector.load %arg5[%c0_8, %c0_9] : memref<1x128xf32, #tpu.memory_space<vmem>>, vector<1x128xf32>
    %10 = vector.broadcast %9 : vector<1x128xf32> to vector<256x128xf32>
    %11 = arith.addf %8, %10 : vector<256x128xf32>
    %12 = math.tanh %11 : vector<256x128xf32>
    %13 = tpu.transpose %12, [1, 0] : vector<256x128xf32> -> vector<128x256xf32>
    %c0_10 = arith.constant 0 : index
    %c0_11 = arith.constant 0 : index
    %14 = vector.load %arg6[%c0_10, %c0_11] : memref<8x128xf32, #tpu.memory_space<vmem>>, vector<8x128xf32>
    %cst_12 = arith.constant dense<0.000000e+00> : vector<8x256xf32>
    %15 = tpu.matmul %14, %13, %cst_12 {dimension_numbers = #tpu.dot_dimension_numbers<[1], [0], [0], [1], [0, 0, 1, 1], [], []>} : vector<8x128xf32>, vector<128x256xf32>, vector<8x256xf32> -> vector<8x256xf32>
    %16 = vector.extract_strided_slice %15 {offsets = [0, 0], sizes = [1, 256], strides = [1, 1]} : vector<8x256xf32> to vector<1x256xf32>
    %c0_13 = arith.constant 0 : index
    %c0_14 = arith.constant 0 : index
    %17 = vector.load %arg7[%c0_13, %c0_14] : memref<1x1xf32, #tpu.memory_space<vmem>>, vector<1x1xf32>
    %18 = vector.broadcast %17 : vector<1x1xf32> to vector<1x256xf32>
    %19 = arith.addf %16, %18 : vector<1x256xf32>
    %20 = vector.shape_cast %19 : vector<1x256xf32> to vector<1x1x256xf32>
    %c0_15 = arith.constant 0 : index
    %c0_16 = arith.constant 0 : index
    %c0_17 = arith.constant 0 : index
    %21 = vector.load %arg8[%c0_15, %c0_16, %c0_17] : memref<1x1x256xf32, #tpu.memory_space<vmem>>, vector<1x1x256xf32>
    tpu.vector_store %arg8[%c0_15, %c0_16, %c0_17], %20 {strides = array<i32>} : memref<1x1x256xf32, #tpu.memory_space<vmem>>, vector<1x1x256xf32>,
    return
  }
  func.func @transform_0(%arg0: i32) -> (i32, i32) {
    %c0_i32 = arith.constant 0 : i32
    %c0_i32_0 = arith.constant 0 : i32
    return %arg0, %c0_i32 : i32, i32
  }
  func.func @transform_1(%arg0: i32) -> (i32, i32) {
    %c0_i32 = arith.constant 0 : i32
    %c0_i32_0 = arith.constant 0 : i32
    %c0_i32_1 = arith.constant 0 : i32
    return %c0_i32, %c0_i32_0 : i32, i32
  }
  func.func @transform_2(%arg0: i32) -> (i32, i32) {
    %c0_i32 = arith.constant 0 : i32
    %c0_i32_0 = arith.constant 0 : i32
    %c0_i32_1 = arith.constant 0 : i32
    return %c0_i32, %c0_i32_0 : i32, i32
  }
  func.func @transform_3(%arg0: i32) -> (i32, i32) {
    %c0_i32 = arith.constant 0 : i32
    %c0_i32_0 = arith.constant 0 : i32
    %c0_i32_1 = arith.constant 0 : i32
    return %c0_i32, %c0_i32_0 : i32, i32
  }
  func.func @transform_4(%arg0: i32) -> (i32, i32) {
    %c0_i32 = arith.constant 0 : i32
    %c0_i32_0 = arith.constant 0 : i32
    %c0_i32_1 = arith.constant 0 : i32
    return %c0_i32, %c0_i32_0 : i32, i32
  }
  func.func @transform_5(%arg0: i32) -> (i32, i32) {
    %c0_i32 = arith.constant 0 : i32
    %c0_i32_0 = arith.constant 0 : i32
    %c0_i32_1 = arith.constant 0 : i32
    return %c0_i32, %c0_i32_0 : i32, i32
  }
  func.func @transform_6(%arg0: i32) -> (i32, i32) {
    %c0_i32 = arith.constant 0 : i32
    %c0_i32_0 = arith.constant 0 : i32
    %c0_i32_1 = arith.constant 0 : i32
    return %c0_i32, %c0_i32_0 : i32, i32
  }
  func.func @transform_7(%arg0: i32) -> (i32, i32, i32) {
    %c0_i32 = arith.constant 0 : i32
    %c0_i32_0 = arith.constant 0 : i32
    %c0_i32_1 = arith.constant 0 : i32
    return %arg0, %c0_i32, %c0_i32_0 : i32, i32, i32
  }
}

</mosaic_0001>

<llo_original>
// kernel: tpu_custom_call.1
$region0: #{tpu_custom_call.1}
  #allocation0 [shape = 'u32[]', space=smem, size = 0x4, offset = 0x4, fixed_abs, tag = 'smem constant byte address 0x4 - core index']
  #allocation1 [shape = 'u32[144,128]{1,0:T(1,128)}', space=vmem, size = 0x12000, scoped, tag = 'internal scratch']
  #allocation2 [shape = 'f32[1,1]{1,0:T(1,128)S(1)}', space=vmem, size = 0x200, scoped, tag = 'scoped memory for tpu_custom_call.1']
  %s0 = inlined_call_operand.vmem [shape: f32[256,32], index: 0, kind: input, shape index: {}]
  %s1 = inlined_call_operand.vmem [shape: f32[32,128], index: 1, kind: input, shape index: {}]
  %s2 = inlined_call_operand.vmem [shape: f32[1,128], index: 2, kind: input, shape index: {}]
  %s3 = inlined_call_operand.vmem [shape: f32[128,128], index: 3, kind: input, shape index: {}]
  %s4 = inlined_call_operand.vmem [shape: f32[1,128], index: 4, kind: input, shape index: {}]
  %s5 = inlined_call_operand.vmem [shape: f32[8,128], index: 5, kind: input, shape index: {}]
  %s6 = inlined_call_operand.<no memory space> [shape: f32[1,1], index: 6, kind: input, shape index: {}]
  %s7 = inlined_call_operand.hbm [shape: f32[1,1,256], index: 7, kind: output, shape index: {}]
  %s8 = sld [smem:[#allocation0]]
  $region38: #{tpu_custom_call.1} parent=0
    _
  %s10 = ssub.s32 1, %s8
  %s11 = scalar_select 0, %s10, %s8
  %v12 = vstv %s6
  %13 = vst [vmem:[#allocation2] sm:$0x1] %v12
  $region1: #{tpu_custom_call.1} parent=0
    #allocation3 [shape = 'u8[1024]{0}', space=vmem, size = 0x400, scoped, tag = 'output window, operand 0, single buffered']
    #allocation4 [shape = 's32[1]{0}', space=sflag, size = 0x4, scoped, tag = 'scoped memory for tpu_custom_call.1']
    %14 = vsyncpa [#allocation4], 0
    // Predicated region
    $region2: #{tpu_custom_call.1} parent=1 // pred_check
      _
    $region3: #{tpu_custom_call.1} parent=1 // pred_check_branch
      %16 = sbr.rel (0) target = $region5
    $region4: #{tpu_custom_call.1} parent=1 // pred_region
      _
    $region5: #{tpu_custom_call.1} parent=1 // pred_fallthru
      _
    // Predicated region
    $region6: #{tpu_custom_call.1} parent=1 // pred_check
      _
    $region7: #{tpu_custom_call.1} parent=1 // pred_check_branch
      %18 = sbr.rel (0) target = $region9
    $region8: #{tpu_custom_call.1} parent=1 // pred_region
      _
    $region9: #{tpu_custom_call.1} parent=1 // pred_fallthru
      _
    // Predicated region
    $region10: #{tpu_custom_call.1} parent=1 // pred_check
      _
    $region11: #{tpu_custom_call.1} parent=1 // pred_check_branch
      %20 = sbr.rel (0) target = $region13
    $region12: #{tpu_custom_call.1} parent=1 // pred_region
      _
    $region13: #{tpu_custom_call.1} parent=1 // pred_fallthru
      _
    // Predicated region
    $region14: #{tpu_custom_call.1} parent=1 // pred_check
      _
    $region15: #{tpu_custom_call.1} parent=1 // pred_check_branch
      %22 = sbr.rel (0) target = $region17
    $region16: #{tpu_custom_call.1} parent=1 // pred_region
      _
    $region17: #{tpu_custom_call.1} parent=1 // pred_fallthru
      _
    // Predicated region
    $region18: #{tpu_custom_call.1} parent=1 // pred_check
      _
    $region19: #{tpu_custom_call.1} parent=1 // pred_check_branch
      %24 = sbr.rel (0) target = $region21
    $region20: #{tpu_custom_call.1} parent=1 // pred_region
      _
    $region21: #{tpu_custom_call.1} parent=1 // pred_fallthru
      _
    // Predicated region
    $region22: #{tpu_custom_call.1} parent=1 // pred_check
      _
    $region23: #{tpu_custom_call.1} parent=1 // pred_check_branch
      %26 = sbr.rel (0) target = $region25
    $region24: #{tpu_custom_call.1} parent=1 // pred_region
      _
    $region25: #{tpu_custom_call.1} parent=1 // pred_fallthru
      _
    // Predicated region
    $region26: #{tpu_custom_call.1} parent=1 // pred_check
      _
    $region27: #{tpu_custom_call.1} parent=1 // pred_check_branch
      %28 = sbr.rel (0) target = $region29
    $region28: #{tpu_custom_call.1} parent=1 // pred_region
      _
    $region29: #{tpu_custom_call.1} parent=1 // pred_fallthru
      _
    %v29 = vld [vmem:[%s0] sm:$0xff]
    %v30 = vld [vmem:[%s0 + $0x8] sm:$0xff]
    %v31 = vld [vmem:[%s0 + $0x10] sm:$0xff]
    %v32 = vld [vmem:[%s0 + $0x18] sm:$0xff]
    %v33 = vld [vmem:[%s0 + $0x20] sm:$0xff]
    %v34 = vld [vmem:[%s0 + $0x28] sm:$0xff]
    %v35 = vld [vmem:[%s0 + $0x30] sm:$0xff]
    %v36 = vld [vmem:[%s0 + $0x38] sm:$0xff]
    %v37 = vld [vmem:[%s0 + $0x40] sm:$0xff]
    %v38 = vld [vmem:[%s0 + $0x48] sm:$0xff]
    %v39 = vld [vmem:[%s0 + $0x50] sm:$0xff]
    %v40 = vld [vmem:[%s0 + $0x58] sm:$0xff]
    %v41 = vld [vmem:[%s0 + $0x60] sm:$0xff]
    %v42 = vld [vmem:[%s0 + $0x68] sm:$0xff]
    %v43 = vld [vmem:[%s0 + $0x70] sm:$0xff]
    %v44 = vld [vmem:[%s0 + $0x78] sm:$0xff]
    %v45 = vld [vmem:[%s0 + $0x80] sm:$0xff]
    %v46 = vld [vmem:[%s0 + $0x88] sm:$0xff]
    %v47 = vld [vmem:[%s0 + $0x90] sm:$0xff]
    %v48 = vld [vmem:[%s0 + $0x98] sm:$0xff]
    %v49 = vld [vmem:[%s0 + $0xa0] sm:$0xff]
    %v50 = vld [vmem:[%s0 + $0xa8] sm:$0xff]
    %v51 = vld [vmem:[%s0 + $0xb0] sm:$0xff]
    %v52 = vld [vmem:[%s0 + $0xb8] sm:$0xff]
    %v53 = vld [vmem:[%s0 + $0xc0] sm:$0xff]
    %v54 = vld [vmem:[%s0 + $0xc8] sm:$0xff]
    %v55 = vld [vmem:[%s0 + $0xd0] sm:$0xff]
    %v56 = vld [vmem:[%s0 + $0xd8] sm:$0xff]
    %v57 = vld [vmem:[%s0 + $0xe0] sm:$0xff]
    %v58 = vld [vmem:[%s0 + $0xe8] sm:$0xff]
    %v59 = vld [vmem:[%s0 + $0xf0] sm:$0xff]
    %v60 = vld [vmem:[%s0 + $0xf8] sm:$0xff]
    %v61 = vld [vmem:[%s1] sm:$0xff]
    %v62 = vld [vmem:[%s1 + $0x8] sm:$0xff]
    %v63 = vld [vmem:[%s1 + $0x10] sm:$0xff]
    %v64 = vld [vmem:[%s1 + $0x18] sm:$0xff]
    %v65 = vld [vmem:[%s2] sm:$0x1]
    %v67 = vlaneseq
    %v68 = vshrl.u32 %v67, 7
    %v69 = vsub.s32 0, %v68
    %v70 = vrot.slane %v65, %v69
    %vm72 = vcmask 261120
    %v74 = vsel %vm72, %v29, 0
    %v77 = vsel %vm72, %v30, 0
    %v80 = vsel %vm72, %v31, 0
    %v83 = vsel %vm72, %v32, 0
    %v86 = vsel %vm72, %v33, 0
    %v89 = vsel %vm72, %v34, 0
    %v92 = vsel %vm72, %v35, 0
    %v95 = vsel %vm72, %v36, 0
    %v98 = vsel %vm72, %v37, 0
    %v101 = vsel %vm72, %v38, 0
    %v104 = vsel %vm72, %v39, 0
    %v107 = vsel %vm72, %v40, 0
    %v110 = vsel %vm72, %v41, 0
    %v113 = vsel %vm72, %v42, 0
    %v116 = vsel %vm72, %v43, 0
    %v119 = vsel %vm72, %v44, 0
    %v122 = vsel %vm72, %v45, 0
    %v125 = vsel %vm72, %v46, 0
    %v128 = vsel %vm72, %v47, 0
    %v131 = vsel %vm72, %v48, 0
    %v134 = vsel %vm72, %v49, 0
    %v137 = vsel %vm72, %v50, 0
    %v140 = vsel %vm72, %v51, 0
    %v143 = vsel %vm72, %v52, 0
    %v146 = vsel %vm72, %v53, 0
    %v149 = vsel %vm72, %v54, 0
    %v152 = vsel %vm72, %v55, 0
    %v155 = vsel %vm72, %v56, 0
    %v158 = vsel %vm72, %v57, 0
    %v161 = vsel %vm72, %v58, 0
    %v164 = vsel %vm72, %v59, 0
    %v167 = vsel %vm72, %v60, 0
    %169 = vmatprep.subr.mxu0 0.0
    %170 = vmatpush1.msra.mxu0 %v61
    %171 = vmatprep.subr.mxu0 0.0
    %172 = vmatpush1.msra.mxu0 %v62
    %173 = vmatprep.subr.mxu0 0.0
    %174 = vmatpush1.msra.mxu0 %v63
    %175 = vmatprep.subr.mxu0 0.0
    %176 = vmatpush1.msra.mxu0 %v64
    %177 = vmatprep.subr.mxu0 0.0
    %178 = vmatpush1.msra.mxu0 0.0
    %179 = vmatprep.subr.mxu0 0.0
    %180 = vmatpush1.msra.mxu0 0.0
    %181 = vmatprep.subr.mxu0 0.0
    %182 = vmatpush1.msra.mxu0 0.0
    %183 = vmatprep.subr.mxu0 0.0
    %184 = vmatpush1.msra.mxu0 0.0
    %185 = vmatprep.subr.mxu0 0.0
    %186 = vmatpush1.msra.mxu0 0.0
    %187 = vmatprep.subr.mxu0 0.0
    %188 = vmatpush1.msra.mxu0 0.0
    %189 = vmatprep.subr.mxu0 0.0
    %190 = vmatpush1.msra.mxu0 0.0
    %191 = vmatprep.subr.mxu0 0.0
    %192 = vmatpush1.msra.mxu0 0.0
    %193 = vmatprep.subr.mxu0 0.0
    %194 = vmatpush1.msra.mxu0 0.0
    %195 = vmatprep.subr.mxu0 0.0
    %196 = vmatpush1.msra.mxu0 0.0
    %197 = vmatprep.subr.mxu0 0.0
    %198 = vmatpush1.msra.mxu0 0.0
    %199 = vmatprep.subr.mxu0 0.0
    %200 = vmatpush1.msra.mxu0 0.0
    %201 = vmatprep.subr.mxu0 0.0
    %202 = vmatpush1.msra.mxu0 0.0
    %203 = vmatprep.subr.mxu0 0.0
    %204 = vmatpush1.msra.mxu0 0.0
    %205 = vmatprep.subr.mxu0 0.0
    %206 = vmatpush1.msra.mxu0 0.0
    %207 = vmatprep.subr.mxu0 0.0
    %208 = vmatpush1.msra.mxu0 0.0
    %209 = vmatprep.subr.mxu0 0.0
    %210 = vmatpush1.msra.mxu0 0.0
    %211 = vmatprep.subr.mxu0 0.0
    %212 = vmatpush1.msra.mxu0 0.0
    %213 = vmatprep.subr.mxu0 0.0
    %214 = vmatpush1.msra.mxu0 0.0
    %215 = vmatprep.subr.mxu0 0.0
    %216 = vmatpush1.msra.mxu0 0.0
    %217 = vmatprep.subr.mxu0 0.0
    %218 = vmatpush1.msra.mxu0 0.0
    %219 = vmatprep.subr.mxu0 0.0
    %220 = vmatpush1.msra.mxu0 0.0
    %221 = vmatprep.subr.mxu0 0.0
    %222 = vmatpush1.msra.mxu0 0.0
    %223 = vmatprep.subr.mxu0 0.0
    %224 = vmatpush1.msra.mxu0 0.0
    %225 = vmatprep.subr.mxu0 0.0
    %226 = vmatpush1.msra.mxu0 0.0
    %227 = vmatprep.subr.mxu0 0.0
    %228 = vmatpush1.msra.mxu0 0.0
    %229 = vmatprep.subr.mxu0 0.0
    %230 = vmatpush1.msra.mxu0 0.0
    %231 = vmatprep.subr.mxu0 0.0
    %232 = vmatpush1.msra.mxu0 0.0
    %233 = vmatprep.mubr.f32.mxu0 0.0
    %234 = vmatmul.mubr.f32.gmra.mrb[0].mxu0 %v74
    %v235 = vpop.f32.mrb[0].mxu0
    %v236 = vadd.f32 %v70, %v235
    %v237 = vpop.f32.mrb[0].mxu0
    %238 = vmatprep.mubr.f32.mxu0 0.0
    %239 = vmatmul.mubr.f32.gmra.mrb[0].mxu0 %v77
    %v240 = vpop.f32.mrb[0].mxu0
    %v241 = vadd.f32 %v70, %v240
    %v242 = vpop.f32.mrb[0].mxu0
    %243 = vmatprep.mubr.f32.mxu0 0.0
    %244 = vmatmul.mubr.f32.gmra.mrb[0].mxu0 %v80
    %v245 = vpop.f32.mrb[0].mxu0
    %v246 = vadd.f32 %v70, %v245
    %v247 = vpop.f32.mrb[0].mxu0
    %248 = vmatprep.mubr.f32.mxu0 0.0
    %249 = vmatmul.mubr.f32.gmra.mrb[0].mxu0 %v83
    %v250 = vpop.f32.mrb[0].mxu0
    %v251 = vadd.f32 %v70, %v250
    %v252 = vpop.f32.mrb[0].mxu0
    %253 = vmatprep.mubr.f32.mxu0 0.0
    %254 = vmatmul.mubr.f32.gmra.mrb[0].mxu0 %v86
    %v255 = vpop.f32.mrb[0].mxu0
    %v256 = vadd.f32 %v70, %v255
    %v257 = vpop.f32.mrb[0].mxu0
    %258 = vmatprep.mubr.f32.mxu0 0.0
    %259 = vmatmul.mubr.f32.gmra.mrb[0].mxu0 %v89
    %v260 = vpop.f32.mrb[0].mxu0
    %v261 = vadd.f32 %v70, %v260
    %v262 = vpop.f32.mrb[0].mxu0
    %263 = vmatprep.mubr.f32.mxu0 0.0
    %264 = vmatmul.mubr.f32.gmra.mrb[0].mxu0 %v92
    %v265 = vpop.f32.mrb[0].mxu0
    %v266 = vadd.f32 %v70, %v265
    %v267 = vpop.f32.mrb[0].mxu0
    %268 = vmatprep.mubr.f32.mxu0 0.0
    %269 = vmatmul.mubr.f32.gmra.mrb[0].mxu0 %v95
    %v270 = vpop.f32.mrb[0].mxu0
    %v271 = vadd.f32 %v70, %v270
    %v272 = vpop.f32.mrb[0].mxu0
    %273 = vmatprep.mubr.f32.mxu0 0.0
    %274 = vmatmul.mubr.f32.gmra.mrb[0].mxu0 %v98
    %v275 = vpop.f32.mrb[0].mxu0
    %v276 = vadd.f32 %v70, %v275
    %v277 = vpop.f32.mrb[0].mxu0
    %278 = vmatprep.mubr.f32.mxu0 0.0
    %279 = vmatmul.mubr.f32.gmra.mrb[0].mxu0 %v101
    %v280 = vpop.f32.mrb[0].mxu0
    %v281 = vadd.f32 %v70, %v280
    %v282 = vpop.f32.mrb[0].mxu0
    %283 = vmatprep.mubr.f32.mxu0 0.0
    %284 = vmatmul.mubr.f32.gmra.mrb[0].mxu0 %v104
    %v285 = vpop.f32.mrb[0].mxu0
    %v286 = vadd.f32 %v70, %v285
    %v287 = vpop.f32.mrb[0].mxu0
    %288 = vmatprep.mubr.f32.mxu0 0.0
    %289 = vmatmul.mubr.f32.gmra.mrb[0].mxu0 %v107
    %v290 = vpop.f32.mrb[0].mxu0
    %v291 = vadd.f32 %v70, %v290
    %v292 = vpop.f32.mrb[0].mxu0
    %293 = vmatprep.mubr.f32.mxu0 0.0
    %294 = vmatmul.mubr.f32.gmra.mrb[0].mxu0 %v110
    %v295 = vpop.f32.mrb[0].mxu0
    %v296 = vadd.f32 %v70, %v295
    %v297 = vpop.f32.mrb[0].mxu0
    %298 = vmatprep.mubr.f32.mxu0 0.0
    %299 = vmatmul.mubr.f32.gmra.mrb[0].mxu0 %v113
    %v300 = vpop.f32.mrb[0].mxu0
    %v301 = vadd.f32 %v70, %v300
    %v302 = vpop.f32.mrb[0].mxu0
    %303 = vmatprep.mubr.f32.mxu0 0.0
    %304 = vmatmul.mubr.f32.gmra.mrb[0].mxu0 %v116
    %v305 = vpop.f32.mrb[0].mxu0
    %v306 = vadd.f32 %v70, %v305
    %v307 = vpop.f32.mrb[0].mxu0
    %308 = vmatprep.mubr.f32.mxu0 0.0
    %309 = vmatmul.mubr.f32.gmra.mrb[0].mxu0 %v119
    %v310 = vpop.f32.mrb[0].mxu0
    %v311 = vadd.f32 %v70, %v310
    %v312 = vpop.f32.mrb[0].mxu0
    %313 = vmatprep.mubr.f32.mxu0 0.0
    %314 = vmatmul.mubr.f32.gmra.mrb[0].mxu0 %v122
    %v315 = vpop.f32.mrb[0].mxu0
    %v316 = vadd.f32 %v70, %v315
    %v317 = vpop.f32.mrb[0].mxu0
    %318 = vmatprep.mubr.f32.mxu0 0.0
    %319 = vmatmul.mubr.f32.gmra.mrb[0].mxu0 %v125
    %v320 = vpop.f32.mrb[0].mxu0
    %v321 = vadd.f32 %v70, %v320
    %v322 = vpop.f32.mrb[0].mxu0
    %323 = vmatprep.mubr.f32.mxu0 0.0
    %324 = vmatmul.mubr.f32.gmra.mrb[0].mxu0 %v128
    %v325 = vpop.f32.mrb[0].mxu0
    %v326 = vadd.f32 %v70, %v325
    %v327 = vpop.f32.mrb[0].mxu0
    %328 = vmatprep.mubr.f32.mxu0 0.0
    %329 = vmatmul.mubr.f32.gmra.mrb[0].mxu0 %v131
    %v330 = vpop.f32.mrb[0].mxu0
    %v331 = vadd.f32 %v70, %v330
    %v332 = vpop.f32.mrb[0].mxu0
    %333 = vmatprep.mubr.f32.mxu0 0.0
    %334 = vmatmul.mubr.f32.gmra.mrb[0].mxu0 %v134
    %v335 = vpop.f32.mrb[0].mxu0
    %v336 = vadd.f32 %v70, %v335
    %v337 = vpop.f32.mrb[0].mxu0
    %338 = vmatprep.mubr.f32.mxu0 0.0
    %339 = vmatmul.mubr.f32.gmra.mrb[0].mxu0 %v137
    %v340 = vpop.f32.mrb[0].mxu0
    %v341 = vadd.f32 %v70, %v340
    %v342 = vpop.f32.mrb[0].mxu0
    %343 = vmatprep.mubr.f32.mxu0 0.0
    %344 = vmatmul.mubr.f32.gmra.mrb[0].mxu0 %v140
    %v345 = vpop.f32.mrb[0].mxu0
    %v346 = vadd.f32 %v70, %v345
    %v347 = vpop.f32.mrb[0].mxu0
    %348 = vmatprep.mubr.f32.mxu0 0.0
    %349 = vmatmul.mubr.f32.gmra.mrb[0].mxu0 %v143
    %v350 = vpop.f32.mrb[0].mxu0
    %v351 = vadd.f32 %v70, %v350
    %v352 = vpop.f32.mrb[0].mxu0
    %353 = vmatprep.mubr.f32.mxu0 0.0
    %354 = vmatmul.mubr.f32.gmra.mrb[0].mxu0 %v146
    %v355 = vpop.f32.mrb[0].mxu0
    %v356 = vadd.f32 %v70, %v355
    %v357 = vpop.f32.mrb[0].mxu0
    %358 = vmatprep.mubr.f32.mxu0 0.0
    %359 = vmatmul.mubr.f32.gmra.mrb[0].mxu0 %v149
    %v360 = vpop.f32.mrb[0].mxu0
    %v361 = vadd.f32 %v70, %v360
    %v362 = vpop.f32.mrb[0].mxu0
    %363 = vmatprep.mubr.f32.mxu0 0.0
    %364 = vmatmul.mubr.f32.gmra.mrb[0].mxu0 %v152
    %v365 = vpop.f32.mrb[0].mxu0
    %v366 = vadd.f32 %v70, %v365
    %v367 = vpop.f32.mrb[0].mxu0
    %368 = vmatprep.mubr.f32.mxu0 0.0
    %369 = vmatmul.mubr.f32.gmra.mrb[0].mxu0 %v155
    %v370 = vpop.f32.mrb[0].mxu0
    %v371 = vadd.f32 %v70, %v370
    %v372 = vpop.f32.mrb[0].mxu0
    %373 = vmatprep.mubr.f32.mxu0 0.0
    %374 = vmatmul.mubr.f32.gmra.mrb[0].mxu0 %v158
    %v375 = vpop.f32.mrb[0].mxu0
    %v376 = vadd.f32 %v70, %v375
    %v377 = vpop.f32.mrb[0].mxu0
    %378 = vmatprep.mubr.f32.mxu0 0.0
    %379 = vmatmul.mubr.f32.gmra.mrb[0].mxu0 %v161
    %v380 = vpop.f32.mrb[0].mxu0
    %v381 = vadd.f32 %v70, %v380
    %v382 = vpop.f32.mrb[0].mxu0
    %383 = vmatprep.mubr.f32.mxu0 0.0
    %384 = vmatmul.mubr.f32.gmra.mrb[0].mxu0 %v164
    %v385 = vpop.f32.mrb[0].mxu0
    %v386 = vadd.f32 %v70, %v385
    %v387 = vpop.f32.mrb[0].mxu0
    %388 = vmatprep.mubr.f32.mxu0 0.0
    %389 = vmatmul.mubr.f32.gmra.mrb[0].mxu0 %v167
    %v390 = vpop.f32.mrb[0].mxu0
    %v391 = vadd.f32 %v70, %v390
    %v392 = vpop.f32.mrb[0].mxu0
    %393 = vdwg.mxu0
    %v394 = vtanh.pop %v236
    %v395 = vtanh.pop %v241
    %v396 = vtanh.pop %v246
    %v397 = vtanh.pop %v251
    %v398 = vtanh.pop %v256
    %v399 = vtanh.pop %v261
    %v400 = vtanh.pop %v266
    %v401 = vtanh.pop %v271
    %v402 = vtanh.pop %v276
    %v403 = vtanh.pop %v281
    %v404 = vtanh.pop %v286
    %v405 = vtanh.pop %v291
    %v406 = vtanh.pop %v296
    %v407 = vtanh.pop %v301
    %v408 = vtanh.pop %v306
    %v409 = vtanh.pop %v311
    %v410 = vtanh.pop %v316
    %v411 = vtanh.pop %v321
    %v412 = vtanh.pop %v326
    %v413 = vtanh.pop %v331
    %v414 = vtanh.pop %v336
    %v415 = vtanh.pop %v341
    %v416 = vtanh.pop %v346
    %v417 = vtanh.pop %v351
    %v418 = vtanh.pop %v356
    %v419 = vtanh.pop %v361
    %v420 = vtanh.pop %v366
    %v421 = vtanh.pop %v371
    %v422 = vtanh.pop %v376
    %v423 = vtanh.pop %v381
    %v424 = vtanh.pop %v386
    %v425 = vtanh.pop %v391
    %v426 = vld [vmem:[%s3] sm:$0xff]
    %v427 = vld [vmem:[%s3 + $0x8] sm:$0xff]
    %v428 = vld [vmem:[%s3 + $0x10] sm:$0xff]
    %v429 = vld [vmem:[%s3 + $0x18] sm:$0xff]
    %v430 = vld [vmem:[%s3 + $0x20] sm:$0xff]
    %v431 = vld [vmem:[%s3 + $0x28] sm:$0xff]
    %v432 = vld [vmem:[%s3 + $0x30] sm:$0xff]
    %v433 = vld [vmem:[%s3 + $0x38] sm:$0xff]
    %v434 = vld [vmem:[%s3 + $0x40] sm:$0xff]
    %v435 = vld [vmem:[%s3 + $0x48] sm:$0xff]
    %v436 = vld [vmem:[%s3 + $0x50] sm:$0xff]
    %v437 = vld [vmem:[%s3 + $0x58] sm:$0xff]
    %v438 = vld [vmem:[%s3 + $0x60] sm:$0xff]
    %v439 = vld [vmem:[%s3 + $0x68] sm:$0xff]
    %v440 = vld [vmem:[%s3 + $0x70] sm:$0xff]
    %v441 = vld [vmem:[%s3 + $0x78] sm:$0xff]
    %v442 = vld [vmem:[%s4] sm:$0x1]
    %v444 = vlaneseq
    %v445 = vshrl.u32 %v444, 7
    %v446 = vsub.s32 0, %v445
    %v447 = vrot.slane %v442, %v446
    %449 = vmatprep.subr.mxu0 0.0
    %450 = vmatpush1.msra.mxu0 %v426
    %451 = vmatprep.subr.mxu0 0.0
    %452 = vmatpush1.msra.mxu0 %v427
    %453 = vmatprep.subr.mxu0 0.0
    %454 = vmatpush1.msra.mxu0 %v428
    %455 = vmatprep.subr.mxu0 0.0
    %456 = vmatpush1.msra.mxu0 %v429
    %457 = vmatprep.subr.mxu0 0.0
    %458 = vmatpush1.msra.mxu0 %v430
    %459 = vmatprep.subr.mxu0 0.0
    %460 = vmatpush1.msra.mxu0 %v431
    %461 = vmatprep.subr.mxu0 0.0
    %462 = vmatpush1.msra.mxu0 %v432
    %463 = vmatprep.subr.mxu0 0.0
    %464 = vmatpush1.msra.mxu0 %v433
    %465 = vmatprep.subr.mxu0 0.0
    %466 = vmatpush1.msra.mxu0 %v434
    %467 = vmatprep.subr.mxu0 0.0
    %468 = vmatpush1.msra.mxu0 %v435
    %469 = vmatprep.subr.mxu0 0.0
    %470 = vmatpush1.msra.mxu0 %v436
    %471 = vmatprep.subr.mxu0 0.0
    %472 = vmatpush1.msra.mxu0 %v437
    %473 = vmatprep.subr.mxu0 0.0
    %474 = vmatpush1.msra.mxu0 %v438
    %475 = vmatprep.subr.mxu0 0.0
    %476 = vmatpush1.msra.mxu0 %v439
    %477 = vmatprep.subr.mxu0 0.0
    %478 = vmatpush1.msra.mxu0 %v440
    %479 = vmatprep.subr.mxu0 0.0
    %480 = vmatpush1.msra.mxu0 %v441
    %481 = vmatprep.subr.mxu0 0.0
    %482 = vmatpush1.msra.mxu0 0.0
    %483 = vmatprep.subr.mxu0 0.0
    %484 = vmatpush1.msra.mxu0 0.0
    %485 = vmatprep.subr.mxu0 0.0
    %486 = vmatpush1.msra.mxu0 0.0
    %487 = vmatprep.subr.mxu0 0.0
    %488 = vmatpush1.msra.mxu0 0.0
    %489 = vmatprep.subr.mxu0 0.0
    %490 = vmatpush1.msra.mxu0 0.0
    %491 = vmatprep.subr.mxu0 0.0
    %492 = vmatpush1.msra.mxu0 0.0
    %493 = vmatprep.subr.mxu0 0.0
    %494 = vmatpush1.msra.mxu0 0.0
    %495 = vmatprep.subr.mxu0 0.0
    %496 = vmatpush1.msra.mxu0 0.0
    %497 = vmatprep.subr.mxu0 0.0
    %498 = vmatpush1.msra.mxu0 0.0
    %499 = vmatprep.subr.mxu0 0.0
    %500 = vmatpush1.msra.mxu0 0.0
    %501 = vmatprep.subr.mxu0 0.0
    %502 = vmatpush1.msra.mxu0 0.0
    %503 = vmatprep.subr.mxu0 0.0
    %504 = vmatpush1.msra.mxu0 0.0
    %505 = vmatprep.subr.mxu0 0.0
    %506 = vmatpush1.msra.mxu0 0.0
    %507 = vmatprep.subr.mxu0 0.0
    %508 = vmatpush1.msra.mxu0 0.0
    %509 = vmatprep.subr.mxu0 0.0
    %510 = vmatpush1.msra.mxu0 0.0
    %511 = vmatprep.subr.mxu0 0.0
    %512 = vmatpush1.msra.mxu0 0.0
    %513 = vmatprep.mubr.f32.mxu0 0.0
    %514 = vmatmul.mubr.f32.gmra.mrb[0].mxu0 %v394
    %v515 = vpop.f32.mrb[0].mxu0
    %v516 = vadd.f32 %v447, %v515
    %v517 = vpop.f32.mrb[0].mxu0
    %518 = vmatprep.mubr.f32.mxu0 0.0
    %519 = vmatmul.mubr.f32.gmra.mrb[0].mxu0 %v395
    %v520 = vpop.f32.mrb[0].mxu0
    %v521 = vadd.f32 %v447, %v520
    %v522 = vpop.f32.mrb[0].mxu0
    %523 = vmatprep.mubr.f32.mxu0 0.0
    %524 = vmatmul.mubr.f32.gmra.mrb[0].mxu0 %v396
    %v525 = vpop.f32.mrb[0].mxu0
    %v526 = vadd.f32 %v447, %v525
    %v527 = vpop.f32.mrb[0].mxu0
    %528 = vmatprep.mubr.f32.mxu0 0.0
    %529 = vmatmul.mubr.f32.gmra.mrb[0].mxu0 %v397
    %v530 = vpop.f32.mrb[0].mxu0
    %v531 = vadd.f32 %v447, %v530
    %v532 = vpop.f32.mrb[0].mxu0
    %533 = vmatprep.mubr.f32.mxu0 0.0
    %534 = vmatmul.mubr.f32.gmra.mrb[0].mxu0 %v398
    %v535 = vpop.f32.mrb[0].mxu0
    %v536 = vadd.f32 %v447, %v535
    %v537 = vpop.f32.mrb[0].mxu0
    %538 = vmatprep.mubr.f32.mxu0 0.0
    %539 = vmatmul.mubr.f32.gmra.mrb[0].mxu0 %v399
    %v540 = vpop.f32.mrb[0].mxu0
    %v541 = vadd.f32 %v447, %v540
    %v542 = vpop.f32.mrb[0].mxu0
    %543 = vmatprep.mubr.f32.mxu0 0.0
    %544 = vmatmul.mubr.f32.gmra.mrb[0].mxu0 %v400
    %v545 = vpop.f32.mrb[0].mxu0
    %v546 = vadd.f32 %v447, %v545
    %v547 = vpop.f32.mrb[0].mxu0
    %548 = vmatprep.mubr.f32.mxu0 0.0
    %549 = vmatmul.mubr.f32.gmra.mrb[0].mxu0 %v401
    %v550 = vpop.f32.mrb[0].mxu0
    %v551 = vadd.f32 %v447, %v550
    %v552 = vpop.f32.mrb[0].mxu0
    %553 = vmatprep.mubr.f32.mxu0 0.0
    %554 = vmatmul.mubr.f32.gmra.mrb[0].mxu0 %v402
    %v555 = vpop.f32.mrb[0].mxu0
    %v556 = vadd.f32 %v447, %v555
    %v557 = vpop.f32.mrb[0].mxu0
    %558 = vmatprep.mubr.f32.mxu0 0.0
    %559 = vmatmul.mubr.f32.gmra.mrb[0].mxu0 %v403
    %v560 = vpop.f32.mrb[0].mxu0
    %v561 = vadd.f32 %v447, %v560
    %v562 = vpop.f32.mrb[0].mxu0
    %563 = vmatprep.mubr.f32.mxu0 0.0
    %564 = vmatmul.mubr.f32.gmra.mrb[0].mxu0 %v404
    %v565 = vpop.f32.mrb[0].mxu0
    %v566 = vadd.f32 %v447, %v565
    %v567 = vpop.f32.mrb[0].mxu0
    %568 = vmatprep.mubr.f32.mxu0 0.0
    %569 = vmatmul.mubr.f32.gmra.mrb[0].mxu0 %v405
    %v570 = vpop.f32.mrb[0].mxu0
    %v571 = vadd.f32 %v447, %v570
    %v572 = vpop.f32.mrb[0].mxu0
    %573 = vmatprep.mubr.f32.mxu0 0.0
    %574 = vmatmul.mubr.f32.gmra.mrb[0].mxu0 %v406
    %v575 = vpop.f32.mrb[0].mxu0
    %v576 = vadd.f32 %v447, %v575
    %v577 = vpop.f32.mrb[0].mxu0
    %578 = vmatprep.mubr.f32.mxu0 0.0
    %579 = vmatmul.mubr.f32.gmra.mrb[0].mxu0 %v407
    %v580 = vpop.f32.mrb[0].mxu0
    %v581 = vadd.f32 %v447, %v580
    %v582 = vpop.f32.mrb[0].mxu0
    %583 = vmatprep.mubr.f32.mxu0 0.0
    %584 = vmatmul.mubr.f32.gmra.mrb[0].mxu0 %v408
    %v585 = vpop.f32.mrb[0].mxu0
    %v586 = vadd.f32 %v447, %v585
    %v587 = vpop.f32.mrb[0].mxu0
    %588 = vmatprep.mubr.f32.mxu0 0.0
    %589 = vmatmul.mubr.f32.gmra.mrb[0].mxu0 %v409
    %v590 = vpop.f32.mrb[0].mxu0
    %v591 = vadd.f32 %v447, %v590
    %v592 = vpop.f32.mrb[0].mxu0
    %593 = vmatprep.mubr.f32.mxu0 0.0
    %594 = vmatmul.mubr.f32.gmra.mrb[0].mxu0 %v410
    %v595 = vpop.f32.mrb[0].mxu0
    %v596 = vadd.f32 %v447, %v595
    %v597 = vpop.f32.mrb[0].mxu0
    %598 = vmatprep.mubr.f32.mxu0 0.0
    %599 = vmatmul.mubr.f32.gmra.mrb[0].mxu0 %v411
    %v600 = vpop.f32.mrb[0].mxu0
    %v601 = vadd.f32 %v447, %v600
    %v602 = vpop.f32.mrb[0].mxu0
    %603 = vmatprep.mubr.f32.mxu0 0.0
    %604 = vmatmul.mubr.f32.gmra.mrb[0].mxu0 %v412
    %v605 = vpop.f32.mrb[0].mxu0
    %v606 = vadd.f32 %v447, %v605
    %v607 = vpop.f32.mrb[0].mxu0
    %608 = vmatprep.mubr.f32.mxu0 0.0
    %609 = vmatmul.mubr.f32.gmra.mrb[0].mxu0 %v413
    %v610 = vpop.f32.mrb[0].mxu0
    %v611 = vadd.f32 %v447, %v610
    %v612 = vpop.f32.mrb[0].mxu0
    %613 = vmatprep.mubr.f32.mxu0 0.0
    %614 = vmatmul.mubr.f32.gmra.mrb[0].mxu0 %v414
    %v615 = vpop.f32.mrb[0].mxu0
    %v616 = vadd.f32 %v447, %v615
    %v617 = vpop.f32.mrb[0].mxu0
    %618 = vmatprep.mubr.f32.mxu0 0.0
    %619 = vmatmul.mubr.f32.gmra.mrb[0].mxu0 %v415
    %v620 = vpop.f32.mrb[0].mxu0
    %v621 = vadd.f32 %v447, %v620
    %v622 = vpop.f32.mrb[0].mxu0
    %623 = vmatprep.mubr.f32.mxu0 0.0
    %624 = vmatmul.mubr.f32.gmra.mrb[0].mxu0 %v416
    %v625 = vpop.f32.mrb[0].mxu0
    %v626 = vadd.f32 %v447, %v625
    %v627 = vpop.f32.mrb[0].mxu0
    %628 = vmatprep.mubr.f32.mxu0 0.0
    %629 = vmatmul.mubr.f32.gmra.mrb[0].mxu0 %v417
    %v630 = vpop.f32.mrb[0].mxu0
    %v631 = vadd.f32 %v447, %v630
    %v632 = vpop.f32.mrb[0].mxu0
    %633 = vmatprep.mubr.f32.mxu0 0.0
    %634 = vmatmul.mubr.f32.gmra.mrb[0].mxu0 %v418
    %v635 = vpop.f32.mrb[0].mxu0
    %v636 = vadd.f32 %v447, %v635
    %v637 = vpop.f32.mrb[0].mxu0
    %638 = vmatprep.mubr.f32.mxu0 0.0
    %639 = vmatmul.mubr.f32.gmra.mrb[0].mxu0 %v419
    %v640 = vpop.f32.mrb[0].mxu0
    %v641 = vadd.f32 %v447, %v640
    %v642 = vpop.f32.mrb[0].mxu0
    %643 = vmatprep.mubr.f32.mxu0 0.0
    %644 = vmatmul.mubr.f32.gmra.mrb[0].mxu0 %v420
    %v645 = vpop.f32.mrb[0].mxu0
    %v646 = vadd.f32 %v447, %v645
    %v647 = vpop.f32.mrb[0].mxu0
    %648 = vmatprep.mubr.f32.mxu0 0.0
    %649 = vmatmul.mubr.f32.gmra.mrb[0].mxu0 %v421
    %v650 = vpop.f32.mrb[0].mxu0
    %v651 = vadd.f32 %v447, %v650
    %v652 = vpop.f32.mrb[0].mxu0
    %653 = vmatprep.mubr.f32.mxu0 0.0
    %654 = vmatmul.mubr.f32.gmra.mrb[0].mxu0 %v422
    %v655 = vpop.f32.mrb[0].mxu0
    %v656 = vadd.f32 %v447, %v655
    %v657 = vpop.f32.mrb[0].mxu0
    %658 = vmatprep.mubr.f32.mxu0 0.0
    %659 = vmatmul.mubr.f32.gmra.mrb[0].mxu0 %v423
    %v660 = vpop.f32.mrb[0].mxu0
    %v661 = vadd.f32 %v447, %v660
    %v662 = vpop.f32.mrb[0].mxu0
    %663 = vmatprep.mubr.f32.mxu0 0.0
    %664 = vmatmul.mubr.f32.gmra.mrb[0].mxu0 %v424
    %v665 = vpop.f32.mrb[0].mxu0
    %v666 = vadd.f32 %v447, %v665
    %v667 = vpop.f32.mrb[0].mxu0
    %668 = vmatprep.mubr.f32.mxu0 0.0
    %669 = vmatmul.mubr.f32.gmra.mrb[0].mxu0 %v425
    %v670 = vpop.f32.mrb[0].mxu0
    %v671 = vadd.f32 %v447, %v670
    %v672 = vpop.f32.mrb[0].mxu0
    %673 = vdwg.mxu0
    %v674 = vtanh.pop %v516
    %v675 = vtanh.pop %v521
    %v676 = vtanh.pop %v526
    %v677 = vtanh.pop %v531
    %v678 = vtanh.pop %v536
    %v679 = vtanh.pop %v541
    %v680 = vtanh.pop %v546
    %v681 = vtanh.pop %v551
    %v682 = vtanh.pop %v556
    %v683 = vtanh.pop %v561
    %v684 = vtanh.pop %v566
    %v685 = vtanh.pop %v571
    %v686 = vtanh.pop %v576
    %v687 = vtanh.pop %v581
    %v688 = vtanh.pop %v586
    %v689 = vtanh.pop %v591
    %v690 = vtanh.pop %v596
    %v691 = vtanh.pop %v601
    %v692 = vtanh.pop %v606
    %v693 = vtanh.pop %v611
    %v694 = vtanh.pop %v616
    %v695 = vtanh.pop %v621
    %v696 = vtanh.pop %v626
    %v697 = vtanh.pop %v631
    %v698 = vtanh.pop %v636
    %v699 = vtanh.pop %v641
    %v700 = vtanh.pop %v646
    %v701 = vtanh.pop %v651
    %v702 = vtanh.pop %v656
    %v703 = vtanh.pop %v661
    %v704 = vtanh.pop %v666
    %v705 = vtanh.pop %v671
    %v706 = vld [vmem:[%s5] sm:$0xff]
    %707 = vmatprep.subr.mxu0 0.0
    %708 = vmatpush1.xpose.msra.mxu0 %v674
    %709 = vmatprep.subr.mxu0 0.0
    %710 = vmatpush1.xpose.msra.mxu0 %v675
    %711 = vmatprep.subr.mxu0 0.0
    %712 = vmatpush1.xpose.msra.mxu0 %v676
    %713 = vmatprep.subr.mxu0 0.0
    %714 = vmatpush1.xpose.msra.mxu0 %v677
    %715 = vmatprep.subr.mxu0 0.0
    %716 = vmatpush1.xpose.msra.mxu0 %v678
    %717 = vmatprep.subr.mxu0 0.0
    %718 = vmatpush1.xpose.msra.mxu0 %v679
    %719 = vmatprep.subr.mxu0 0.0
    %720 = vmatpush1.xpose.msra.mxu0 %v680
    %721 = vmatprep.subr.mxu0 0.0
    %722 = vmatpush1.xpose.msra.mxu0 %v681
    %723 = vmatprep.subr.mxu0 0.0
    %724 = vmatpush1.xpose.msra.mxu0 %v682
    %725 = vmatprep.subr.mxu0 0.0
    %726 = vmatpush1.xpose.msra.mxu0 %v683
    %727 = vmatprep.subr.mxu0 0.0
    %728 = vmatpush1.xpose.msra.mxu0 %v684
    %729 = vmatprep.subr.mxu0 0.0
    %730 = vmatpush1.xpose.msra.mxu0 %v685
    %731 = vmatprep.subr.mxu0 0.0
    %732 = vmatpush1.xpose.msra.mxu0 %v686
    %733 = vmatprep.subr.mxu0 0.0
    %734 = vmatpush1.xpose.msra.mxu0 %v687
    %735 = vmatprep.subr.mxu0 0.0
    %736 = vmatpush1.xpose.msra.mxu0 %v688
    %737 = vmatprep.subr.mxu0 0.0
    %738 = vmatpush1.xpose.msra.mxu0 %v689
    %739 = vmatprep.subr.mxu0 0.0
    %740 = vmatpush1.xpose.msra.mxu0 %v690
    %741 = vmatprep.subr.mxu0 0.0
    %742 = vmatpush1.xpose.msra.mxu0 %v691
    %743 = vmatprep.subr.mxu0 0.0
    %744 = vmatpush1.xpose.msra.mxu0 %v692
    %745 = vmatprep.subr.mxu0 0.0
    %746 = vmatpush1.xpose.msra.mxu0 %v693
    %747 = vmatprep.subr.mxu0 0.0
    %748 = vmatpush1.xpose.msra.mxu0 %v694
    %749 = vmatprep.subr.mxu0 0.0
    %750 = vmatpush1.xpose.msra.mxu0 %v695
    %751 = vmatprep.subr.mxu0 0.0
    %752 = vmatpush1.xpose.msra.mxu0 %v696
    %753 = vmatprep.subr.mxu0 0.0
    %754 = vmatpush1.xpose.msra.mxu0 %v697
    %755 = vmatprep.subr.mxu0 0.0
    %756 = vmatpush1.xpose.msra.mxu0 %v698
    %757 = vmatprep.subr.mxu0 0.0
    %758 = vmatpush1.xpose.msra.mxu0 %v699
    %759 = vmatprep.subr.mxu0 0.0
    %760 = vmatpush1.xpose.msra.mxu0 %v700
    %761 = vmatprep.subr.mxu0 0.0
    %762 = vmatpush1.xpose.msra.mxu0 %v701
    %763 = vmatprep.subr.mxu0 0.0
    %764 = vmatpush1.xpose.msra.mxu0 %v702
    %765 = vmatprep.subr.mxu0 0.0
    %766 = vmatpush1.xpose.msra.mxu0 %v703
    %767 = vmatprep.subr.mxu0 0.0
    %768 = vmatpush1.xpose.msra.mxu0 %v704
    %769 = vmatprep.subr.mxu0 0.0
    %770 = vmatpush1.xpose.msra.mxu0 %v705
    %771 = vmatprep.mubr.f32.mxu0 0.0
    %772 = vmatmul.mubr.f32.gmra.mrb[0].mxu0 %v706
    %v773 = vpop.f32.mrb[0].mxu0
    %v774 = vadd.f32 0.0, %v773
    %v775 = vpop.f32.mrb[0].mxu0
    %v776 = vadd.f32 0.0, %v775
    %777 = vdwg.mxu0
    %v778 = vld [vmem:[#allocation2] sm:$0x1]
    %780 = vset.pattern.permute.xlu0 0
    %781 = vperm.xlu0 %780, %v778
    %v782 = vpop.permute.xlu0 %781
    %v784 = vlaneseq
    %v785 = vshrl.u32 %v784, 7
    %v786 = vsub.s32 0, %v785
    %v787 = vrot.slane %v782, %v786
    %v788 = vadd.f32 %v774, %v787
    %v789 = vadd.f32 %v776, %v787
    %v792 = vcombine.low %v788, %v789
    %v794 = vunpack.c.l.s4 1966171168
    %v795 = vunpack.c.0.s8 %v794
    %v796 = vlaneseq
    %v797 = vshrl.u32 %v796, 7
    %v798 = vsub.s32 %v795, %v797
    %v799 = vrot.slane %v792, %v798
    %v801 = vunpack.c.l.s4 1966171168
    %v802 = vunpack.c.0.s8 %v801
    %v803 = vlaneseq
    %v804 = vshrl.u32 %v803, 7
    %v805 = vsub.s32 %v802, %v804
    %v806 = vrot.slane %v799, %v805
    %v808 = vlaneseq
    %vm809 = vcmp.ge.s32.totalorder %v808, 0
    %vm810 = vcmp.lt.s32.totalorder %v808, 256
    %vm811 = vmand %vm809, %vm810
    %812 = vst.msk [vmem:[#allocation3] sm:$0x3] %vm811, %v806
    // Predicated region
    $region30: #{tpu_custom_call.1} parent=1 // pred_check
      _
    $region31: #{tpu_custom_call.1} parent=1 // pred_check_branch
      %814 = sbr.rel (0) target = $region33
    $region32: #{tpu_custom_call.1} parent=1 // pred_region
      %s816 = ssub.s32 32, 32
      %817 = vsyncadd [#allocation4], %s816
      %s819 = sshll.u32 [#allocation3], 4
      %s820 = int_to_ptr.vmem [resolvable:$true] %s819
      %822 = dma.vmem_to_hbm [thread:$0]  %s820, 32, %s7, [#allocation4]
    $region33: #{tpu_custom_call.1} parent=1 // pred_fallthru
      _
    // Predicated region
    $region34: #{tpu_custom_call.1} parent=1 // pred_check
      _
    $region35: #{tpu_custom_call.1} parent=1 // pred_check_branch
      %824 = sbr.rel (0) target = $region37
    $region36: #{tpu_custom_call.1} parent=1 // pred_region
      %825 = dma.done [#allocation4], 32
    $region37: #{tpu_custom_call.1} parent=1 // pred_fallthru
      _
    %826 = vsyncpa [#allocation4], 1

</llo_original>
